<compile_context>
chip_gen: v7x
topology: tpu7x:2x2x1
jax: 0.10.0
libtpu: 0.0.40
codegen_flags: <defaults>
</compile_context>

<pallas_src>
import functools
import math

import jax
import jax.numpy as jnp
from jax.experimental import pallas as pl
from jax.experimental.pallas import tpu as pltpu

_LANE = 128


def _cdiv(a, b):
    return -(-a // b)


def _vmem_capacity_bytes():
    try:
        return int(pltpu.get_tpu_info().vmem_capacity_bytes)
    except Exception:
        return 64 * 1024 * 1024


_VMEM_CAP = _vmem_capacity_bytes()
# Scoped-VMEM limit: ~half physical (=> ~64 MiB on v5e/v6e, ~32 MiB on v7x).
_VMEM_LIMIT = min(64 * 1024 * 1024, max(16 * 1024 * 1024, _VMEM_CAP // 2))
# Elementwise HBM block bytes (~4 MiB on v5e/v6e, ~2 MiB on v7x; x4 buffers).
_EW_BLOCK_BYTES = max(2 << 20, _VMEM_LIMIT // 16)
# Reduction block budget in elements (f32 compute footprint per block).
_RED_BLOCK_ELEMS = max(1 << 18, _VMEM_LIMIT // 64)


def _sublane_multiple(dtype):
    """Sublane packing multiple: 8 for 32-bit, 16 for 16-bit, 32 for 8-bit."""
    itemsize = jnp.dtype(dtype).itemsize
    return max(8, 32 // max(itemsize, 1))


def _min_steps_block(total, block, mult, min_steps=4):
    """Shrink `block` (kept a multiple of `mult`) so the grid axis has at least
    `min_steps` steps (pipeline depth); no-op for small data."""
    if total < min_steps * mult or block <= mult:
        return block
    if _cdiv(total, block) >= min_steps:
        return block
    return min(block, max(mult, (_cdiv(total, min_steps) // mult) * mult))


def _lane_view(x):
    """Lane-dense 2-D view of the flattened tensor, never padded.

    Returns (mat, ragged): if a 128-multiple divisor W (<= 8192) of n exists the
    view is (n // W, W) gridded over rows; otherwise (1, n) gridded over lanes
    (trailing partial block handled by Pallas write-masking)."""
    n = x.size
    flat = x.reshape(-1)
    for w in range(8192, 0, -_LANE):
        if w <= n and n % w == 0:
            return flat.reshape(n // w, w), False
    return flat.reshape(1, n), True


# ----------------------------- elementwise ----------------------------------

def _ew_kernel(x_ref, o_ref, *, op, params):
    x = x_ref[...]
    if op == "sigmoid":
        # one EUP transcendental instead of exp + per-element divide
        y = 0.5 * jnp.tanh(0.5 * x.astype(jnp.float32)) + 0.5
    elif op == "tanh":
        y = jnp.tanh(x.astype(jnp.float32))
    elif op == "clamp":
        y = x
        if params["min"] is not None:
            y = jnp.maximum(y, params["min"])
        if params["max"] is not None:
            y = jnp.minimum(y, params["max"])
    else:  # identity (short-circuited in the wrapper)
        y = x
    o_ref[...] = y.astype(o_ref.dtype)


def _ew_blocks(mat, ragged, itemsize, mult):
    rows, w = mat.shape
    if not ragged:
        target = max(mult, (_EW_BLOCK_BYTES // (w * itemsize)) // mult * mult)
        br = rows if rows <= target else target
        br = _min_steps_block(rows, br, mult)
        return (_cdiv(rows, br),), (br, w), (lambda i: (i, 0))
    # (1, n) fallback: 1-of-8 sublane occupancy only costs vregs (mem-bound path),
    # but there is no pad/slice HBM traffic.
    cap = max(_LANE, (_EW_BLOCK_BYTES // (8 * itemsize)) // _LANE * _LANE)
    bc = w if w <= cap else cap
    bc = _min_steps_block(w, bc, _LANE)
    return (_cdiv(w, bc),), (1, bc), (lambda i: (0, i))


def _elementwise(x, op, params=None):
    if op == "identity" or x.size == 0:
        return x
    params = params or {}
    orig_shape = x.shape
    itemsize = jnp.dtype(x.dtype).itemsize
    mult = _sublane_multiple(x.dtype)

    mat, ragged = _lane_view(x)
    grid, block, idx_map = _ew_blocks(mat, ragged, itemsize, mult)

    out = pl.pallas_call(
        functools.partial(_ew_kernel, op=op, params=params),
        out_shape=jax.ShapeDtypeStruct(mat.shape, x.dtype),
        grid_spec=pltpu.PrefetchScalarGridSpec(
            num_scalar_prefetch=0,
            grid=grid,
            in_specs=[pl.BlockSpec(block, idx_map)],
            out_specs=pl.BlockSpec(block, idx_map),
        ),
        compiler_params=pltpu.CompilerParams(
            dimension_semantics=("parallel",),
            vmem_limit_bytes=_VMEM_LIMIT,
        ),
    )(mat)
    return out.reshape(orig_shape)


# --------------------------- reduction helpers -------------------------------

def _as_pre_c_post(shape, dim):
    dim = dim % len(shape)
    pre = int(math.prod(shape[:dim])) if dim > 0 else 1
    c = shape[dim]
    post = int(math.prod(shape[dim + 1:])) if dim + 1 < len(shape) else 1
    return pre, c, post, dim


def _mid_blocks(pre, c, post):
    """Block sizes (PB, TP) for mid-axis reductions on a (pre, C, post) view."""
    lane_cap = max(_LANE, (_RED_BLOCK_ELEMS // max(c, 1)) // _LANE * _LANE)
    tp = post if post <= lane_cap else lane_cap
    pb = min(pre, max(1, _RED_BLOCK_ELEMS // max(c * tp, 1)))
    if pb < pre:
        pb = min(pre, max(8, (pb // 8) * 8))      # keep out-block sublanes aligned
    steps_post = _cdiv(post, tp)
    if steps_post < 4:
        pb = _min_steps_block(pre, pb, 8, min_steps=_cdiv(4, steps_post))
    return pb, tp


def _last_row_block(pre, c, dtype):
    mult = _sublane_multiple(dtype)
    cap = max(mult, (_RED_BLOCK_ELEMS // max(c, 1)) // mult * mult)
    bp = pre if pre <= cap else cap
    return _min_steps_block(pre, bp, mult)


# ------------------------------ softmax --------------------------------------

def _softmax_mid_kernel(x_ref, o_ref, *, log):
    x = x_ref[...].astype(jnp.float32)             # (PB, C, TP)
    m = jnp.max(x, axis=1, keepdims=True)
    e = jnp.exp(x - m)
    s = jnp.sum(e, axis=1, keepdims=True)
    if log:
        y = (x - m) - jnp.log(s)
    else:
        # one reciprocal per (row, lane) + broadcast multiply (C-fold fewer divides)
        y = e * pl.reciprocal(s, approx=False)
    o_ref[...] = y.astype(o_ref.dtype)


def _softmax_last_kernel(x_ref, o_ref, *, log):
    x = x_ref[...].astype(jnp.float32)             # (BP, C), reduce over lanes
    m = jnp.max(x, axis=-1, keepdims=True)
    e = jnp.exp(x - m)
    s = jnp.sum(e, axis=-1, keepdims=True)
    if log:
        y = (x - m) - jnp.log(s)
    else:
        y = e * pl.reciprocal(s, approx=False)
    o_ref[...] = y.astype(o_ref.dtype)


def _softmax(x, dim, log=False):
    if x.size == 0:
        return x
    pre, c, post, dim = _as_pre_c_post(x.shape, dim)

    if post == 1:
        if c < _LANE:
            # c on lanes would waste >=128/c of every vreg / DMA row; XLA is
            # near-roofline for this (rare for this module) small-last-dim case.
            return jax.nn.log_softmax(x, axis=dim) if log else jax.nn.softmax(x, axis=dim)
        x2 = x.reshape(pre, c)
        bp = _last_row_block(pre, c, x.dtype)
        out = pl.pallas_call(
            functools.partial(_softmax_last_kernel, log=log),
            out_shape=jax.ShapeDtypeStruct((pre, c), x.dtype),
            grid_spec=pltpu.PrefetchScalarGridSpec(
                num_scalar_prefetch=0,
                grid=(_cdiv(pre, bp),),
                in_specs=[pl.BlockSpec((bp, c), lambda i: (i, 0))],
                out_specs=pl.BlockSpec((bp, c), lambda i: (i, 0)),
            ),
            compiler_params=pltpu.CompilerParams(
                dimension_semantics=("parallel",),
                vmem_limit_bytes=_VMEM_LIMIT,
            ),
        )(x2)
        return out.reshape(x.shape)

    x3 = x.reshape(pre, c, post)
    pb, tp = _mid_blocks(pre, c, post)
    out = pl.pallas_call(
        functools.partial(_softmax_mid_kernel, log=log),
        out_shape=jax.ShapeDtypeStruct((pre, c, post), x.dtype),
        grid_spec=pltpu.PrefetchScalarGridSpec(
            num_scalar_prefetch=0,
            grid=(_cdiv(pre, pb), _cdiv(post, tp)),
            in_specs=[pl.BlockSpec((pb, c, tp), lambda i, j: (i, 0, j))],
            out_specs=pl.BlockSpec((pb, c, tp), lambda i, j: (i, 0, j)),
        ),
        compiler_params=pltpu.CompilerParams(
            dimension_semantics=("parallel", "parallel"),
            vmem_limit_bytes=_VMEM_LIMIT,
        ),
    )(x3)
    return out.reshape(x.shape)


# ------------------------------- argmax ---------------------------------------

def _first_max_index(x, m, axis, keepdims=False):
    """First index where x equals the (keepdims) max m; NaN wins, like torch."""
    ids = jax.lax.broadcasted_iota(jnp.int32, x.shape, axis)
    is_max = x == m
    if jnp.issubdtype(x.dtype, jnp.floating):
        is_max = is_max | jnp.isnan(x)
    cand = jnp.where(is_max, ids, jnp.int32(x.shape[axis]))
    return jnp.min(cand, axis=axis, keepdims=keepdims)


def _argmax_mid_kernel(x_ref, o_ref):
    x = x_ref[...]                                  # (PB, C, TP)
    m = jnp.max(x, axis=1, keepdims=True)
    o_ref[...] = _first_max_index(x, m, axis=1).astype(o_ref.dtype)   # dense (PB, TP)


def _argmax_last_kernel(x_ref, o_ref):
    x = x_ref[...]                                  # (BP, C)
    m = jnp.max(x, axis=-1, keepdims=True)
    o_ref[...] = _first_max_index(x, m, axis=1, keepdims=True).astype(o_ref.dtype)


def _argmax_dim(x, dim):
    # TODO(synk): torch.argmax returns int64; with JAX x64 disabled this returns int32.
    pre, c, post, dim = _as_pre_c_post(x.shape, dim)
    out_shape = tuple(s for i, s in enumerate(x.shape) if i != dim)

    if post == 1:
        if c < _LANE:
            return jnp.argmax(x, axis=dim).astype(jnp.int32)   # small-last-dim XLA fallback
        x2 = x.reshape(pre, c)
        bp = _last_row_block(pre, c, x.dtype)
        out = pl.pallas_call(
            _argmax_last_kernel,
            out_shape=jax.ShapeDtypeStruct((pre, 1), jnp.int32),
            grid_spec=pltpu.PrefetchScalarGridSpec(
                num_scalar_prefetch=0,
                grid=(_cdiv(pre, bp),),
                in_specs=[pl.BlockSpec((bp, c), lambda i: (i, 0))],
                out_specs=pl.BlockSpec((bp, 1), lambda i: (i, 0)),
            ),
            compiler_params=pltpu.CompilerParams(
                dimension_semantics=("parallel",),
                vmem_limit_bytes=_VMEM_LIMIT,
            ),
        )(x2)
        return out.reshape(out_shape)

    x3 = x.reshape(pre, c, post)
    pb, tp = _mid_blocks(pre, c, post)
    out = pl.pallas_call(
        _argmax_mid_kernel,
        out_shape=jax.ShapeDtypeStruct((pre, post), jnp.int32),
        grid_spec=pltpu.PrefetchScalarGridSpec(
            num_scalar_prefetch=0,
            grid=(_cdiv(pre, pb), _cdiv(post, tp)),
            in_specs=[pl.BlockSpec((pb, c, tp), lambda i, j: (i, 0, j))],
            out_specs=pl.BlockSpec((pb, tp), lambda i, j: (i, j)),
        ),
        compiler_params=pltpu.CompilerParams(
            dimension_semantics=("parallel", "parallel"),
            vmem_limit_bytes=_VMEM_LIMIT,
        ),
    )(x3)
    return out.reshape(out_shape)


def _argmax_partial_kernel(x_ref, mx_ref, idx_ref, *, n):
    """Stage 1 of flat argmax: per-block (max, first flat index) partials."""
    i = pl.program_id(0)
    x = x_ref[...]
    br, wb = x.shape
    r = jax.lax.broadcasted_iota(jnp.int32, x.shape, 0)
    c = jax.lax.broadcasted_iota(jnp.int32, x.shape, 1)
    flat = i * (br * wb) + r * wb + c
    valid = flat < n
    if jnp.issubdtype(x.dtype, jnp.floating):
        neg = jnp.array(-jnp.inf, x.dtype)
    else:
        neg = jnp.array(jnp.iinfo(x.dtype).min, x.dtype)     # native dtype: no f32 cast
    xm = jnp.where(valid, x, neg)
    m = jnp.max(xm, axis=1, keepdims=True)
    m = jnp.max(m, axis=0, keepdims=True)                    # (1, 1) block max
    is_max = xm == m
    if jnp.issubdtype(x.dtype, jnp.floating):
        is_max = is_max | jnp.isnan(xm)                      # NaN wins (torch semantics)
    cand = jnp.where(is_max & valid, flat, jnp.int32(n))
    idx = jnp.min(cand, axis=1, keepdims=True)
    idx = jnp.min(idx, axis=0, keepdims=True)                # first maximal flat index
    mx_ref[...] = jnp.broadcast_to(m, mx_ref.shape)
    idx_ref[...] = jnp.broadcast_to(idx, idx_ref.shape)


def _argmax_flat(x):
    """torch.argmax(x) (dim=None): two-stage parallel reduce over the flat tensor."""
    n = x.size
    itemsize = jnp.dtype(x.dtype).itemsize
    mult = _sublane_multiple(x.dtype)
    mat, ragged = _lane_view(x)
    grid, block, idx_map = _ew_blocks(mat, ragged, itemsize, mult)
    nb = grid[0]

    mx, idx = pl.pallas_call(
        functools.partial(_argmax_partial_kernel, n=n),
        out_shape=(jax.ShapeDtypeStruct((8, nb * _LANE), x.dtype),
                   jax.ShapeDtypeStruct((8, nb * _LANE), jnp.int32)),
        grid_spec=pltpu.PrefetchScalarGridSpec(
            num_scalar_prefetch=0,
            grid=grid,
            in_specs=[pl.BlockSpec(block, idx_map)],
            out_specs=(pl.BlockSpec((8, _LANE), lambda i: (0, i)),
                       pl.BlockSpec((8, _LANE), lambda i: (0, i))),
        ),
        compiler_params=pltpu.CompilerParams(
            dimension_semantics=("parallel",),     # independent per-block partials
            vmem_limit_bytes=_VMEM_LIMIT,
        ),
    )(mat)

    # Stage 2: tiny final reduce (nb elements).  argmax tie-break -> earliest block,
    # combined with in-block first-index -> global first maximal index.
    mx = mx.reshape(8, nb, _LANE)[0, :, 0]
    idx = idx.reshape(8, nb, _LANE)[0, :, 0]
    best = jnp.argmax(mx)
    return idx[best]


def _argmax(x, dim):
    if x.dtype == jnp.bool_:
        x = x.astype(jnp.int32)
    if dim is None:
        return _argmax_flat(x)
    return _argmax_dim(x, dim)


# ------------------------------ Activation -----------------------------------

def _legacy_softmax_dim(ndim):
    # torch.nn.functional._get_softmax_dim legacy heuristic (nn.Softmax(dim=None)).
    return 0 if ndim in (0, 1, 3) else 1


class Activation:
    """JAX/Pallas equivalent of segmentation_models_pytorch base Activation."""

    def __init__(self, name, **params):
        if name is None or name == "identity":
            self._fn = lambda x: x                          # pure no-op, no HBM round-trip
        elif name == "sigmoid":
            self._fn = lambda x: _elementwise(x, "sigmoid")
        elif name == "softmax2d":
            self._fn = lambda x: _softmax(x, dim=1, log=False)
        elif name == "softmax":
            dim = params.get("dim", None)
            self._fn = lambda x: _softmax(
                x, dim=_legacy_softmax_dim(x.ndim) if dim is None else dim, log=False)
        elif name == "logsoftmax":
            dim = params.get("dim", None)
            self._fn = lambda x: _softmax(
                x, dim=_legacy_softmax_dim(x.ndim) if dim is None else dim, log=True)
        elif name == "tanh":
            self._fn = lambda x: _elementwise(x, "tanh")
        elif name == "argmax":
            dim = params.get("dim", None)
            self._fn = lambda x: _argmax(x, dim=dim)
        elif name == "argmax2d":
            self._fn = lambda x: _argmax(x, dim=1)
        elif name == "clamp":
            p = {"min": params.get("min", 0), "max": params.get("max", 1)}
            self._fn = lambda x: _elementwise(x, "clamp", p)
        elif callable(name):
            self._fn = name(**params)
        else:
            raise ValueError(
                "Activation should be callable/sigmoid/softmax/logsoftmax/"
                f"tanh/argmax/argmax2d/clamp/None; got {name}"
            )

    def __call__(self, x):
        return self._fn(x)


if __name__ == "__main__":
    key = jax.random.PRNGKey(0)
    k1, k2, k3 = jax.random.split(key, 3)
    x = jax.random.normal(k1, (2, 4, 16, 16), dtype=jnp.float32)   # NCHW

    y = jax.block_until_ready(Activation("identity")(x))
    assert jnp.allclose(y, x)

    y = jax.block_until_ready(Activation("sigmoid")(x))
    assert jnp.allclose(y, jax.nn.sigmoid(x), atol=1e-5)

    y = jax.block_until_ready(Activation("tanh")(x))
    assert jnp.allclose(y, jnp.tanh(x), atol=1e-5)

    y = jax.block_until_ready(Activation("clamp")(x))
    assert jnp.allclose(y, jnp.clip(x, 0, 1), atol=1e-6)

    # channel (middle-axis) reductions
    y = jax.block_until_ready(Activation("softmax2d")(x))
    assert jnp.allclose(y, jax.nn.softmax(x, axis=1), atol=1e-5)

    y = jax.block_until_ready(Activation("softmax", dim=1)(x))
    assert jnp.allclose(y, jax.nn.softmax(x, axis=1), atol=1e-5)

    y = jax.block_until_ready(Activation("logsoftmax", dim=1)(x))
    assert jnp.allclose(y, jax.nn.log_softmax(x, axis=1), atol=1e-5)

    y = jax.block_until_ready(Activation("argmax2d")(x))
    assert y.shape == (2, 16, 16)
    assert jnp.all(y == jnp.argmax(x, axis=1).astype(jnp.int32))

    # small-last-dim (c < 128) reductions: XLA fallback path
    y = jax.block_until_ready(Activation("softmax", dim=3)(x))
    assert jnp.allclose(y, jax.nn.softmax(x, axis=3), atol=1e-5)
    y = jax.block_until_ready(Activation("argmax", dim=-1)(x))
    assert y.shape == (2, 4, 16)
    assert jnp.all(y == jnp.argmax(x, axis=-1).astype(jnp.int32))

    # wide-last-dim (c >= 128) reductions: Pallas lane-axis path
    x_wide = jax.random.normal(k2, (16, 256), dtype=jnp.float32)
    y = jax.block_until_ready(Activation("softmax", dim=1)(x_wide))
    assert jnp.allclose(y, jax.nn.softmax(x_wide, axis=1), atol=1e-5)
    y = jax.block_until_ready(Activation("argmax", dim=1)(x_wide))
    assert jnp.all(y == jnp.argmax(x_wide, axis=1).astype(jnp.int32))

    # ragged element count (no 128-multiple divisor): padding-free (1, n) path
    x_rag = jax.random.normal(k3, (3, 5, 7), dtype=jnp.float32)
    y = jax.block_until_ready(Activation("sigmoid")(x_rag))
    assert jnp.allclose(y, jax.nn.sigmoid(x_rag), atol=1e-5)

    # flat argmax (dim=None): two-stage parallel partial reduce
    y = jax.block_until_ready(Activation("argmax")(x))
    assert y.shape == () and int(y) == int(jnp.argmax(x))
    y = jax.block_until_ready(Activation("argmax")(x_rag))
    assert int(y) == int(jnp.argmax(x_rag))

    print("KERNEL_OK")
</pallas_src>

<mosaic_0001>
module attributes {stable_mosaic.version = 11 : i64} {
  func.func @_ew_kernel(%arg0: i32, %arg1: memref<1x2048xf32, #tpu.memory_space<vmem>>, %arg2: memref<1x2048xf32, #tpu.memory_space<vmem>>) attributes {dimension_semantics = [#tpu.dimension_semantics<parallel>], iteration_bounds = array<i64: 1>, scalar_prefetch = 0 : i64, scratch_operands = 0 : i64, tpu.core_type = #tpu.core_type<tc>, window_params = [{transform_indices = @transform_0, window_bounds = array<i64: 1, 2048>}, {transform_indices = @transform_1, window_bounds = array<i64: 1, 2048>}]} {
    %c0 = arith.constant 0 : index
    %c0_0 = arith.constant 0 : index
    %0 = vector.load %arg1[%c0, %c0_0] : memref<1x2048xf32, #tpu.memory_space<vmem>>, vector<1x2048xf32>
    %cst = arith.constant 5.000000e-01 : f32
    %1 = vector.broadcast %cst : f32 to vector<1x2048xf32>
    %2 = arith.mulf %1, %0 : vector<1x2048xf32>
    %3 = math.tanh %2 : vector<1x2048xf32>
    %cst_1 = arith.constant 5.000000e-01 : f32
    %4 = vector.broadcast %cst_1 : f32 to vector<1x2048xf32>
    %5 = arith.mulf %4, %3 : vector<1x2048xf32>
    %cst_2 = arith.constant 5.000000e-01 : f32
    %6 = vector.broadcast %cst_2 : f32 to vector<1x2048xf32>
    %7 = arith.addf %5, %6 : vector<1x2048xf32>
    %c0_3 = arith.constant 0 : index
    %c0_4 = arith.constant 0 : index
    %8 = vector.load %arg2[%c0_3, %c0_4] : memref<1x2048xf32, #tpu.memory_space<vmem>>, vector<1x2048xf32>
    tpu.vector_store %arg2[%c0_3, %c0_4], %7 {strides = array<i32>} : memref<1x2048xf32, #tpu.memory_space<vmem>>, vector<1x2048xf32>,
    return
  }
  func.func @transform_0(%arg0: i32) -> (i32, i32) {
    %c0_i32 = arith.constant 0 : i32
    %c0_i32_0 = arith.constant 0 : i32
    return %arg0, %c0_i32 : i32, i32
  }
  func.func @transform_1(%arg0: i32) -> (i32, i32) {
    %c0_i32 = arith.constant 0 : i32
    %c0_i32_0 = arith.constant 0 : i32
    return %arg0, %c0_i32 : i32, i32
  }
}

</mosaic_0001>

<llo_original>
// kernel: tpu_custom_call.1
$region0: #{tpu_custom_call.1}
  #allocation0 [shape = 'u32[]', space=smem, size = 0x4, offset = 0x4, fixed_abs, tag = 'smem constant byte address 0x4 - core index']
  #allocation1 [shape = 'u32[144,128]{1,0:T(1,128)}', space=vmem, size = 0x12000, scoped, tag = 'internal scratch']
  %s0 = inlined_call_operand.hbm [shape: f32[1,2048], index: 0, kind: input, shape index: {}]
  %s1 = inlined_call_operand.hbm [shape: f32[1,2048], index: 1, kind: output, shape index: {}]
  %s2 = sld [smem:[#allocation0]]
  $region18: #{tpu_custom_call.1} parent=0
    _
  %s4 = ssub.s32 1, %s2
  %s5 = scalar_select 0, %s4, %s2
  $region1: #{tpu_custom_call.1} parent=0
    #allocation2 [shape = 'u8[8192]{0}', space=vmem, size = 0x2000, scoped, tag = 'input window, operand 0, single buffered']
    #allocation3 [shape = 's32[1]{0}', space=sflag, size = 0x4, scoped, tag = 'scoped memory for tpu_custom_call.1']
    #allocation4 [shape = 's32[1]{0}', space=sflag, size = 0x4, scoped, tag = 'scoped memory for tpu_custom_call.1']
    #allocation5 [shape = 'u8[8192]{0}', space=vmem, size = 0x2000, scoped, tag = 'output window, operand 0, single buffered']
    %6 = vsyncpa [#allocation3], 0
    %7 = vsyncpa [#allocation4], 0
    // Predicated region
    $region2: #{tpu_custom_call.1} parent=1 // pred_check
      _
    $region3: #{tpu_custom_call.1} parent=1 // pred_check_branch
      %9 = sbr.rel (0) target = $region5
    $region4: #{tpu_custom_call.1} parent=1 // pred_region
      %s11 = ssub.s32 256, 256
      %12 = vsyncadd [#allocation3], %s11
      %s14 = sshll.u32 [#allocation2], 4
      %s15 = int_to_ptr.vmem [resolvable:$true] %s14
      %17 = dma.hbm_to_vmem [thread:$0]  %s0, 256, %s15, [#allocation3]
    $region5: #{tpu_custom_call.1} parent=1 // pred_fallthru
      _
    // Predicated region
    $region6: #{tpu_custom_call.1} parent=1 // pred_check
      _
    $region7: #{tpu_custom_call.1} parent=1 // pred_check_branch
      %19 = sbr.rel (0) target = $region9
    $region8: #{tpu_custom_call.1} parent=1 // pred_region
      %20 = dma.done [#allocation3], 256
    $region9: #{tpu_custom_call.1} parent=1 // pred_fallthru
      _
    %v21 = vld [vmem:[#allocation2] sm:$0xff]
    %v22 = vld [vmem:[#allocation2 + $0x8] sm:$0xff]
    %v23 = vmul.f32 %v21, 0.5
    %v24 = vmul.f32 %v22, 0.5
    %v25 = vtanh.pop %v23
    %v26 = vtanh.pop %v24
    %v27 = vmul.f32 %v25, 0.5
    %v28 = vmul.f32 %v26, 0.5
    %v29 = vadd.f32 %v27, 0.5
    %v30 = vadd.f32 %v28, 0.5
    %31 = vst [vmem:[#allocation5] sm:$0xff] %v29
    %32 = vst [vmem:[#allocation5 + $0x8] sm:$0xff] %v30
    // Predicated region
    $region10: #{tpu_custom_call.1} parent=1 // pred_check
      _
    $region11: #{tpu_custom_call.1} parent=1 // pred_check_branch
      %34 = sbr.rel (0) target = $region13
    $region12: #{tpu_custom_call.1} parent=1 // pred_region
      %s36 = ssub.s32 256, 256
      %37 = vsyncadd [#allocation4], %s36
      %s39 = sshll.u32 [#allocation5], 4
      %s40 = int_to_ptr.vmem [resolvable:$true] %s39
      %42 = dma.vmem_to_hbm [thread:$0]  %s40, 256, %s1, [#allocation4]
    $region13: #{tpu_custom_call.1} parent=1 // pred_fallthru
      _
    // Predicated region
    $region14: #{tpu_custom_call.1} parent=1 // pred_check
      _
    $region15: #{tpu_custom_call.1} parent=1 // pred_check_branch
      %44 = sbr.rel (0) target = $region17
    $region16: #{tpu_custom_call.1} parent=1 // pred_region
      %45 = dma.done [#allocation4], 256
    $region17: #{tpu_custom_call.1} parent=1 // pred_fallthru
      _
    %46 = vsyncpa [#allocation3], 1
    %47 = vsyncpa [#allocation4], 1

</llo_original>
